<compile_context>
chip_gen: v7x
topology: tpu7x:2x2x1
jax: 0.10.0
libtpu: 0.0.40
codegen_flags: <defaults>
</compile_context>

<pallas_src>
import jax
import jax.numpy as jnp
from jax.experimental import pallas as pl
from jax.experimental.pallas import tpu as pltpu


def ntn_kernel(x1_ref, m_ref, b_ref, ut_ref, out_ref):
    # x1_ref : (TN, D)  compute dtype (f32 or bf16)  — one tile of x_1 rows
    # m_ref  : (D, K)   compute dtype — V[:, :D].T + (W . x2).T   (resident)
    # b_ref  : (1, K)   f32           — b + x2 @ V[:, D:].T       (resident)
    # ut_ref : (1, K)   f32           — U.T                       (resident)
    # out_ref: (TN, 1)  f32
    s = jnp.dot(x1_ref[...], m_ref[...],
                preferred_element_type=jnp.float32)            # (TN, K), MXU
    s = s + b_ref[...]                                         # broadcast bias

    # F.normalize(p=1, dim=1): rows / max(L1-norm, 1e-12)
    l1 = jnp.sum(jnp.abs(s), axis=1, keepdims=True)            # (TN, 1)
    s = s * pl.reciprocal(jnp.maximum(l1, 1e-12), approx=False)

    # TODO(synk): inneract is assumed to be relu (create_act arg not given).
    s = jnp.maximum(s, 0.0)

    # apply_u: (TN, K) @ (K, 1) as a VPU multiply + cheap K-lane reduce
    # (avoids a 1-lane-wide MXU op).  Output is only N*4 bytes, so the
    # narrow (TN, 1) store is negligible traffic.
    out_ref[...] = jnp.sum(s * ut_ref[...], axis=1, keepdims=True)


def ntn_forward(x1, x2, V, W, b, U, *, tile_n=256, compute_dtype=jnp.float32):
    """NTN forward: x1 (N,D), x2 (1,D), V (K,2D), W (K,D,D), b (K,), U (K,1)."""
    N, D = x1.shape
    K = V.shape[0]
    f32 = jnp.float32

    # ---- x_2-only precompute, hoisted out of the tile grid (once per call) --
    wx2 = jnp.einsum('kde,e->kd', W.astype(f32), x2[0].astype(f32))    # (K, D)
    m = (V[:, :D].astype(f32) + wx2).T.astype(compute_dtype)           # (D, K)
    b_eff = b[None, :].astype(f32) + x2.astype(f32) @ V[:, D:].astype(f32).T
    u_t = U.astype(f32).reshape(1, K)                                  # (1, K)
    x1c = x1.astype(compute_dtype)

    # ---- choose tile, pad N so every block is full (no partial-tile edge) ---
    if N >= tile_n:
        tn = tile_n
    else:
        tn = max(8, ((N + 7) // 8) * 8)        # round small N up to sublanes
    n_tiles = pl.cdiv(N, tn)
    Np = n_tiles * tn
    if Np != N:
        x1c = jnp.pad(x1c, ((0, Np - N), (0, 0)))

    def resident(shape):
        return pl.BlockSpec(shape, lambda i: (0, 0))

    out = pl.pallas_call(
        ntn_kernel,
        out_shape=jax.ShapeDtypeStruct((Np, 1), f32),
        grid=(n_tiles,),
        in_specs=[
            pl.BlockSpec((tn, D), lambda i: (i, 0)),   # x1 tile
            resident((D, K)),                          # combined weight M
            resident((1, K)),                          # effective bias
            resident((1, K)),                          # U.T
        ],
        out_specs=pl.BlockSpec((tn, 1), lambda i: (i, 0)),
        compiler_params=pltpu.CompilerParams(
            dimension_semantics=("parallel",)),        # megacore on v7x
    )(x1c, m, b_eff, u_t)
    return out[:N]


def ntn_ref(x1, x2, V, W, b, U):
    """Pure-JAX reference mirroring the PyTorch code."""
    D = x1.shape[1]
    v_term = x1 @ V[:, :D].T + x2 @ V[:, D:].T
    wx2 = jnp.einsum('kde,e->kd', W, x2[0])
    w_term = x1 @ wx2.T
    out = v_term + w_term + b[None, :]
    out = out / jnp.maximum(jnp.sum(jnp.abs(out), axis=1, keepdims=True), 1e-12)
    out = jnp.maximum(out, 0.0)
    return out @ U


def glorot_normal(key, shape):
    """xavier_normal_-style init: N(0, sqrt(2/(fan_in+fan_out)))."""
    if len(shape) == 2:
        fan_in, fan_out = shape[1], shape[0]
    else:  # (K, D, D): PyTorch fan_in = D*D, fan_out = K*D
        rf = 1
        for s in shape[2:]:
            rf *= s
        fan_in, fan_out = shape[1] * rf, shape[0] * rf
    std = (2.0 / (fan_in + fan_out)) ** 0.5
    return std * jax.random.normal(key, shape, dtype=jnp.float32)


if __name__ == "__main__":
    D, K = 32, 16                       # input_dim, feature_map_dim
    key = jax.random.PRNGKey(0)
    kx1, kx2, kV, kW, kb, kU, kxs, kxr = jax.random.split(key, 8)

    # Parameters (bias=True, apply_u=True, inneract="relu").
    V = glorot_normal(kV, (K, 2 * D))
    W = glorot_normal(kW, (K, D, D))
    b = jax.random.normal(kb, (K,), dtype=jnp.float32)
    U = glorot_normal(kU, (K, 1))

    # Batched-N case: exercises the tiled, parallel grid (grid=(2,), tile=256).
    N = 512
    x1 = jax.random.normal(kx1, (N, D), dtype=jnp.float32)
    x2 = jax.random.normal(kx2, (1, D), dtype=jnp.float32)

    out = jax.block_until_ready(ntn_forward(x1, x2, V, W, b, U))
    ref = ntn_ref(x1, x2, V, W, b, U)
    assert out.shape == (N, 1)
    assert jnp.allclose(out, ref, atol=1e-5, rtol=1e-5)

    # bf16 compute path (v6e/v7x-native MXU dtype), f32 accumulation.
    out_bf16 = jax.block_until_ready(
        ntn_forward(x1, x2, V, W, b, U, compute_dtype=jnp.bfloat16))
    assert jnp.allclose(out_bf16, ref, atol=5e-2, rtol=5e-2)

    # Ragged N (not a multiple of the tile): exercises the pad-and-slice path.
    Nr = 300
    x1r = jax.random.normal(kxr, (Nr, D), dtype=jnp.float32)
    outr = jax.block_until_ready(ntn_forward(x1r, x2, V, W, b, U))
    refr = ntn_ref(x1r, x2, V, W, b, U)
    assert outr.shape == (Nr, 1)
    assert jnp.allclose(outr, refr, atol=1e-5, rtol=1e-5)

    # Tiny single-tile case matching the original module's typical call.
    Ns = 8
    x1s = jax.random.normal(kxs, (Ns, D), dtype=jnp.float32)
    outs = jax.block_until_ready(ntn_forward(x1s, x2, V, W, b, U))
    refs = ntn_ref(x1s, x2, V, W, b, U)
    assert outs.shape == (Ns, 1)
    assert jnp.allclose(outs, refs, atol=1e-5, rtol=1e-5)

    print("KERNEL_OK")
</pallas_src>

<mosaic_0001>
module attributes {stable_mosaic.version = 11 : i64} {
  func.func @ntn_kernel(%arg0: i32, %arg1: memref<256x32xf32, #tpu.memory_space<vmem>>, %arg2: memref<32x16xf32, #tpu.memory_space<vmem>>, %arg3: memref<1x16xf32, #tpu.memory_space<vmem>>, %arg4: memref<1x16xf32, #tpu.memory_space<vmem>>, %arg5: memref<256x1xf32, #tpu.memory_space<vmem>>) attributes {dimension_semantics = [#tpu.dimension_semantics<parallel>], iteration_bounds = array<i64: 2>, scalar_prefetch = 0 : i64, scratch_operands = 0 : i64, tpu.core_type = #tpu.core_type<tc>, window_params = [{transform_indices = @transform_0, window_bounds = array<i64: 256, 32>}, {pipeline_mode = #tpu.pipeline_mode<synchronous>, transform_indices = @transform_1, window_bounds = array<i64: 32, 16>}, {pipeline_mode = #tpu.pipeline_mode<synchronous>, transform_indices = @transform_2, window_bounds = array<i64: 1, 16>}, {pipeline_mode = #tpu.pipeline_mode<synchronous>, transform_indices = @transform_3, window_bounds = array<i64: 1, 16>}, {transform_indices = @transform_4, window_bounds = array<i64: 256, 1>}]} {
    %c0 = arith.constant 0 : index
    %c0_0 = arith.constant 0 : index
    %0 = vector.load %arg1[%c0, %c0_0] : memref<256x32xf32, #tpu.memory_space<vmem>>, vector<256x32xf32>
    %c0_1 = arith.constant 0 : index
    %c0_2 = arith.constant 0 : index
    %1 = vector.load %arg2[%c0_1, %c0_2] : memref<32x16xf32, #tpu.memory_space<vmem>>, vector<32x16xf32>
    %cst = arith.constant dense<0.000000e+00> : vector<256x16xf32>
    %2 = tpu.matmul %0, %1, %cst {dimension_numbers = #tpu.dot_dimension_numbers<[1], [0], [0], [1], [0, 0, 1, 1], [], []>} : vector<256x32xf32>, vector<32x16xf32>, vector<256x16xf32> -> vector<256x16xf32>
    %c0_3 = arith.constant 0 : index
    %c0_4 = arith.constant 0 : index
    %3 = vector.load %arg3[%c0_3, %c0_4] : memref<1x16xf32, #tpu.memory_space<vmem>>, vector<1x16xf32>
    %4 = vector.broadcast %3 : vector<1x16xf32> to vector<256x16xf32>
    %5 = arith.addf %2, %4 : vector<256x16xf32>
    %6 = math.absf %5 : vector<256x16xf32>
    %cst_5 = arith.constant dense<0.000000e+00> : vector<256xf32>
    %7 = vector.multi_reduction <add>, %6, %cst_5 [1] : vector<256x16xf32> to vector<256xf32>
    %8 = vector.shape_cast %7 : vector<256xf32> to vector<256x1xf32>
    %cst_6 = arith.constant 9.99999996E-13 : f32
    %9 = vector.broadcast %cst_6 : f32 to vector<256x1xf32>
    %10 = arith.maximumf %8, %9 : vector<256x1xf32>
    %11 = tpu.reciprocal %10 : vector<256x1xf32> -> vector<256x1xf32>
    %12 = vector.broadcast %11 : vector<256x1xf32> to vector<256x16xf32>
    %13 = arith.mulf %5, %12 : vector<256x16xf32>
    %cst_7 = arith.constant 0.000000e+00 : f32
    %14 = vector.broadcast %cst_7 : f32 to vector<256x16xf32>
    %15 = arith.maximumf %13, %14 : vector<256x16xf32>
    %c0_8 = arith.constant 0 : index
    %c0_9 = arith.constant 0 : index
    %16 = vector.load %arg4[%c0_8, %c0_9] : memref<1x16xf32, #tpu.memory_space<vmem>>, vector<1x16xf32>
    %17 = vector.broadcast %16 : vector<1x16xf32> to vector<256x16xf32>
    %18 = arith.mulf %15, %17 : vector<256x16xf32>
    %cst_10 = arith.constant dense<0.000000e+00> : vector<256xf32>
    %19 = vector.multi_reduction <add>, %18, %cst_10 [1] : vector<256x16xf32> to vector<256xf32>
    %20 = vector.shape_cast %19 : vector<256xf32> to vector<256x1xf32>
    %c0_11 = arith.constant 0 : index
    %c0_12 = arith.constant 0 : index
    %21 = vector.load %arg5[%c0_11, %c0_12] : memref<256x1xf32, #tpu.memory_space<vmem>>, vector<256x1xf32>
    tpu.vector_store %arg5[%c0_11, %c0_12], %20 {strides = array<i32>} : memref<256x1xf32, #tpu.memory_space<vmem>>, vector<256x1xf32>,
    return
  }
  func.func @transform_0(%arg0: i32) -> (i32, i32) {
    %c0_i32 = arith.constant 0 : i32
    %c0_i32_0 = arith.constant 0 : i32
    return %arg0, %c0_i32 : i32, i32
  }
  func.func @transform_1(%arg0: i32) -> (i32, i32) {
    %c0_i32 = arith.constant 0 : i32
    %c0_i32_0 = arith.constant 0 : i32
    %c0_i32_1 = arith.constant 0 : i32
    return %c0_i32, %c0_i32_0 : i32, i32
  }
  func.func @transform_2(%arg0: i32) -> (i32, i32) {
    %c0_i32 = arith.constant 0 : i32
    %c0_i32_0 = arith.constant 0 : i32
    %c0_i32_1 = arith.constant 0 : i32
    return %c0_i32, %c0_i32_0 : i32, i32
  }
  func.func @transform_3(%arg0: i32) -> (i32, i32) {
    %c0_i32 = arith.constant 0 : i32
    %c0_i32_0 = arith.constant 0 : i32
    %c0_i32_1 = arith.constant 0 : i32
    return %c0_i32, %c0_i32_0 : i32, i32
  }
  func.func @transform_4(%arg0: i32) -> (i32, i32) {
    %c0_i32 = arith.constant 0 : i32
    %c0_i32_0 = arith.constant 0 : i32
    return %arg0, %c0_i32 : i32, i32
  }
}

</mosaic_0001>

<llo_original>
// kernel: tpu_custom_call.1
$region0: #{tpu_custom_call.1}
  #allocation0 [shape = 'u32[]', space=smem, size = 0x4, offset = 0x4, fixed_abs, tag = 'smem constant byte address 0x4 - core index']
  #allocation1 [shape = 'u32[144,128]{1,0:T(1,128)}', space=vmem, size = 0x12000, scoped, tag = 'internal scratch']
  %s0 = inlined_call_operand.vmem [shape: f32[512,32], index: 0, kind: input, shape index: {}]
  %s1 = inlined_call_operand.vmem [shape: f32[32,16], index: 1, kind: input, shape index: {}]
  %s2 = inlined_call_operand.vmem [shape: f32[1,16], index: 2, kind: input, shape index: {}]
  %s3 = inlined_call_operand.vmem [shape: f32[1,16], index: 3, kind: input, shape index: {}]
  %s4 = inlined_call_operand.vmem [shape: f32[512,1], index: 4, kind: output, shape index: {}]
  %s5 = sld [smem:[#allocation0]]
  $region49: #{tpu_custom_call.1} parent=0
    _
  %s7 = ssub.s32 1, %s5
  %s8 = scalar_select 0, %s7, %s5
  loop: start=0, step=1, limit=4
  $region2: #{tpu_custom_call.1} parent=0 // loop_pre_header
    _
  $region3: #{tpu_custom_call.1} parent=0 // loop_header
    %s10 = sphi 0, %s14
    %p11 = scmp.ge.s32.totalorder %s10, 4
    %s20 = sphi 0, %s22
    %s23 = sphi 0, %s20
    %s24 = sphi 0, %s23
    %s40 = sphi 0, %s24
    %s44 = sphi 0, %s44
    %s46 = sphi 0, %s44
    %s47 = sphi 0, %s46
    %s61 = sphi 0, %s47
    %s65 = sphi 0, %s65
    %s67 = sphi 0, %s65
    %s68 = sphi 0, %s67
    %s82 = sphi 0, %s68
    %s86 = sphi 0, %s86
    %s88 = sphi 0, %s86
    %s89 = sphi 0, %s88
    %s103 = sphi 0, %s89
    %s109 = sphi 0, %s111
    %s112 = sphi 0, %s109
    %s113 = sphi 0, %s112
    %s129 = sphi 0, %s113
  $region4: #{tpu_custom_call.1} parent=0 // loop_header_branch
    %13 = sbr.rel (%p11) target = $region8
  $region5: #{tpu_custom_call.1} parent=0 // loop_body
    %s15 = ssub.s32 %s10, 1
    %s16 = ssub.s32 %s10, 2
    %s17 = sadd.s32 %s10, 1
    %s18 = ssub.s32 %s10, %s17
    %p19 = scmp.eq.s32.totalorder %s18, 0
    %s21 = sadd.s32 %s20, 1
    %s22 = scalar_select %p19, %s20, %s21
    %p25 = pneg %p19
    %p26 = scmp.eq.s32.totalorder %s10, 1
    %p27 = por %p25, %p26
    %p28 = scmp.ne.s32.totalorder %s20, %s23
    %p29 = scmp.eq.s32.totalorder %s10, 0
    %p30 = por %p28, %p29
    %p31 = scmp.ne.s32.totalorder %s20, %s23
    %p32 = scmp.eq.s32.totalorder %s15, 1
    %p33 = por %p31, %p32
    %p34 = scmp.ne.s32.totalorder %s23, %s24
    %p35 = scmp.eq.s32.totalorder %s15, 0
    %p36 = por %p34, %p35
    %p37 = scmp.ne.s32.totalorder %s23, %s24
    %p38 = scmp.eq.s32.totalorder %s16, 1
    %p39 = por %p37, %p38
    %p41 = scmp.ne.s32.totalorder %s24, %s40
    %p42 = scmp.eq.s32.totalorder %s16, 0
    %p43 = por %p41, %p42
    %s45 = sadd.s32 %s44, 1
    %p48 = scmp.eq.s32.totalorder %s10, 1
    %p49 = scmp.ne.s32.totalorder %s44, %s46
    %p50 = scmp.eq.s32.totalorder %s10, 0
    %p51 = por %p49, %p50
    %p52 = scmp.ne.s32.totalorder %s44, %s46
    %p53 = scmp.eq.s32.totalorder %s15, 1
    %p54 = por %p52, %p53
    %p55 = scmp.ne.s32.totalorder %s46, %s47
    %p56 = scmp.eq.s32.totalorder %s15, 0
    %p57 = por %p55, %p56
    %p58 = scmp.ne.s32.totalorder %s46, %s47
    %p59 = scmp.eq.s32.totalorder %s16, 1
    %p60 = por %p58, %p59
    %p62 = scmp.ne.s32.totalorder %s47, %s61
    %p63 = scmp.eq.s32.totalorder %s16, 0
    %p64 = por %p62, %p63
    %s66 = sadd.s32 %s65, 1
    %p69 = scmp.eq.s32.totalorder %s10, 1
    %p70 = scmp.ne.s32.totalorder %s65, %s67
    %p71 = scmp.eq.s32.totalorder %s10, 0
    %p72 = por %p70, %p71
    %p73 = scmp.ne.s32.totalorder %s65, %s67
    %p74 = scmp.eq.s32.totalorder %s15, 1
    %p75 = por %p73, %p74
    %p76 = scmp.ne.s32.totalorder %s67, %s68
    %p77 = scmp.eq.s32.totalorder %s15, 0
    %p78 = por %p76, %p77
    %p79 = scmp.ne.s32.totalorder %s67, %s68
    %p80 = scmp.eq.s32.totalorder %s16, 1
    %p81 = por %p79, %p80
    %p83 = scmp.ne.s32.totalorder %s68, %s82
    %p84 = scmp.eq.s32.totalorder %s16, 0
    %p85 = por %p83, %p84
    %s87 = sadd.s32 %s86, 1
    %p90 = scmp.eq.s32.totalorder %s10, 1
    %p91 = scmp.ne.s32.totalorder %s86, %s88
    %p92 = scmp.eq.s32.totalorder %s10, 0
    %p93 = por %p91, %p92
    %p94 = scmp.ne.s32.totalorder %s86, %s88
    %p95 = scmp.eq.s32.totalorder %s15, 1
    %p96 = por %p94, %p95
    %p97 = scmp.ne.s32.totalorder %s88, %s89
    %p98 = scmp.eq.s32.totalorder %s15, 0
    %p99 = por %p97, %p98
    %p100 = scmp.ne.s32.totalorder %s88, %s89
    %p101 = scmp.eq.s32.totalorder %s16, 1
    %p102 = por %p100, %p101
    %p104 = scmp.ne.s32.totalorder %s89, %s103
    %p105 = scmp.eq.s32.totalorder %s16, 0
    %p106 = por %p104, %p105
    %s107 = ssub.s32 %s10, %s17
    %p108 = scmp.eq.s32.totalorder %s107, 0
    %s110 = sadd.s32 %s109, 1
    %s111 = scalar_select %p108, %s109, %s110
    %p114 = pneg %p108
    %p115 = scmp.eq.s32.totalorder %s10, 1
    %p116 = por %p114, %p115
    %p117 = scmp.ne.s32.totalorder %s109, %s112
    %p118 = scmp.eq.s32.totalorder %s10, 0
    %p119 = por %p117, %p118
    %p120 = scmp.ne.s32.totalorder %s109, %s112
    %p121 = scmp.eq.s32.totalorder %s15, 1
    %p122 = por %p120, %p121
    %p123 = scmp.ne.s32.totalorder %s112, %s113
    %p124 = scmp.eq.s32.totalorder %s15, 0
    %p125 = por %p123, %p124
    %p126 = scmp.ne.s32.totalorder %s112, %s113
    %p127 = scmp.eq.s32.totalorder %s16, 1
    %p128 = por %p126, %p127
    %p130 = scmp.ne.s32.totalorder %s113, %s129
    %p131 = scmp.eq.s32.totalorder %s16, 0
    %p132 = por %p130, %p131
    %p133 = scmp.le.s32.totalorder 1, %s10
    %p134 = scmp.lt.s32.totalorder %s10, 3
    %p135 = pnand %p133, %p134
    %p136 = pneg %p135
    // Predicated region
    $region9: #{tpu_custom_call.1} parent=5 // pred_check
      _
    $region10: #{tpu_custom_call.1} parent=5 // pred_check_branch
      %138 = sbr.rel (%p135) target = $region12
    $region11: #{tpu_custom_call.1} parent=5 // pred_region
      %s139 = ssub.s32 %s10, 1
      // Predicated region
      $region13: #{tpu_custom_call.1} parent=11 // pred_check
        %p140 = pneg %p57
      $region14: #{tpu_custom_call.1} parent=11 // pred_check_branch
        %142 = sbr.rel (%p140) target = $region16
      $region15: #{tpu_custom_call.1} parent=11 // pred_region
        _
      $region16: #{tpu_custom_call.1} parent=11 // pred_fallthru
        _
      // Predicated region
      $region17: #{tpu_custom_call.1} parent=11 // pred_check
        %p143 = pneg %p78
      $region18: #{tpu_custom_call.1} parent=11 // pred_check_branch
        %145 = sbr.rel (%p143) target = $region20
      $region19: #{tpu_custom_call.1} parent=11 // pred_region
        _
      $region20: #{tpu_custom_call.1} parent=11 // pred_fallthru
        _
      // Predicated region
      $region21: #{tpu_custom_call.1} parent=11 // pred_check
        %p146 = pneg %p99
      $region22: #{tpu_custom_call.1} parent=11 // pred_check_branch
        %148 = sbr.rel (%p146) target = $region24
      $region23: #{tpu_custom_call.1} parent=11 // pred_region
        _
      $region24: #{tpu_custom_call.1} parent=11 // pred_fallthru
        _
    $region12: #{tpu_custom_call.1} parent=5 // pred_fallthru
      _
    %p149 = scmp.lt.s32.totalorder %s10, 2
    // Predicated region
    $region25: #{tpu_custom_call.1} parent=5 // pred_check
      %p150 = pneg %p149
    $region26: #{tpu_custom_call.1} parent=5 // pred_check_branch
      %152 = sbr.rel (%p150) target = $region28
    $region27: #{tpu_custom_call.1} parent=5 // pred_region
      // Predicated region
      $region29: #{tpu_custom_call.1} parent=27 // pred_check
        %p153 = pneg %p30
      $region30: #{tpu_custom_call.1} parent=27 // pred_check_branch
        %155 = sbr.rel (%p153) target = $region32
      $region31: #{tpu_custom_call.1} parent=27 // pred_region
        %s156 = smul.u32 32, %s10
        %p157 = scmp.lt.s32.totalorder %s156, 63
        %s158 = scalar_select %p157, %s156, 63
        %s159 = smul.addr %s158, 8
        %s160 = scalar_lea.vmem %s0, %s159
        %s161 = smul.u32 32, %s10
      $region32: #{tpu_custom_call.1} parent=27 // pred_fallthru
        _
    $region28: #{tpu_custom_call.1} parent=5 // pred_fallthru
      _
    %p162 = scmp.le.s32.totalorder 1, %s10
    %p163 = scmp.lt.s32.totalorder %s10, 3
    %p164 = pnand %p162, %p163
    %p165 = pneg %p164
    // Predicated region
    $region33: #{tpu_custom_call.1} parent=5 // pred_check
      _
    $region34: #{tpu_custom_call.1} parent=5 // pred_check_branch
      %167 = sbr.rel (%p164) target = $region36
    $region35: #{tpu_custom_call.1} parent=5 // pred_region
      %s168 = ssub.s32 %s10, 1
      %s169 = smul.u32 32, %s15
      %p170 = scmp.lt.s32.totalorder %s169, 63
      %s171 = scalar_select %p170, %s169, 63
      %s172 = smul.addr %s171, 8
      %s173 = scalar_lea.vmem %s0, %s172
      %p174 = pneg %p36
      %p175 = pneg %p33
      %p176 = pneg %p57
      %p177 = pneg %p54
      %p178 = pneg %p78
      %p179 = pneg %p75
      %p180 = pneg %p99
      %p181 = pneg %p96
      %p182 = pneg %p125
      %p183 = pneg %p122
      %s184 = smul.u32 32, %s15
      %p185 = scmp.lt.s32.totalorder %s184, 63
      %s186 = scalar_select %p185, %s184, 63
      %s187 = smul.addr %s186, 8
      %s188 = scalar_lea.vmem %s4, %s187
      %s189 = smul.u32 32, %s15
      %p190 = scmp.lt.s32.totalorder %s189, 63
      %s191 = scalar_select %p190, %s189, 63
      %s192 = smul.addr %s191, 8
      %s193 = scalar_lea.vmem %s0, %s192
      %s194 = smul.u32 32, %s15
      %s195 = smul.u32 32, %s15
      %p196 = scmp.lt.s32.totalorder %s195, 63
      %s197 = scalar_select %p196, %s195, 63
      %s198 = smul.addr %s197, 8
      %s199 = scalar_lea.vmem %s4, %s198
      %s200 = smul.u32 32, %s15
      %v201 = vld [vmem:[%s193] sm:$0xff]
      %v202 = vld [vmem:[%s193 + $0x8] sm:$0xff]
      %v203 = vld [vmem:[%s193 + $0x10] sm:$0xff]
      %v204 = vld [vmem:[%s193 + $0x18] sm:$0xff]
      %v205 = vld [vmem:[%s193 + $0x20] sm:$0xff]
      %v206 = vld [vmem:[%s193 + $0x28] sm:$0xff]
      %v207 = vld [vmem:[%s193 + $0x30] sm:$0xff]
      %v208 = vld [vmem:[%s193 + $0x38] sm:$0xff]
      %v209 = vld [vmem:[%s193 + $0x40] sm:$0xff]
      %v210 = vld [vmem:[%s193 + $0x48] sm:$0xff]
      %v211 = vld [vmem:[%s193 + $0x50] sm:$0xff]
      %v212 = vld [vmem:[%s193 + $0x58] sm:$0xff]
      %v213 = vld [vmem:[%s193 + $0x60] sm:$0xff]
      %v214 = vld [vmem:[%s193 + $0x68] sm:$0xff]
      %v215 = vld [vmem:[%s193 + $0x70] sm:$0xff]
      %v216 = vld [vmem:[%s193 + $0x78] sm:$0xff]
      %v217 = vld [vmem:[%s193 + $0x80] sm:$0xff]
      %v218 = vld [vmem:[%s193 + $0x88] sm:$0xff]
      %v219 = vld [vmem:[%s193 + $0x90] sm:$0xff]
      %v220 = vld [vmem:[%s193 + $0x98] sm:$0xff]
      %v221 = vld [vmem:[%s193 + $0xa0] sm:$0xff]
      %v222 = vld [vmem:[%s193 + $0xa8] sm:$0xff]
      %v223 = vld [vmem:[%s193 + $0xb0] sm:$0xff]
      %v224 = vld [vmem:[%s193 + $0xb8] sm:$0xff]
      %v225 = vld [vmem:[%s193 + $0xc0] sm:$0xff]
      %v226 = vld [vmem:[%s193 + $0xc8] sm:$0xff]
      %v227 = vld [vmem:[%s193 + $0xd0] sm:$0xff]
      %v228 = vld [vmem:[%s193 + $0xd8] sm:$0xff]
      %v229 = vld [vmem:[%s193 + $0xe0] sm:$0xff]
      %v230 = vld [vmem:[%s193 + $0xe8] sm:$0xff]
      %v231 = vld [vmem:[%s193 + $0xf0] sm:$0xff]
      %v232 = vld [vmem:[%s193 + $0xf8] sm:$0xff]
      %v233 = vld [vmem:[%s1] sm:$0xff]
      %v234 = vld [vmem:[%s1 + $0x8] sm:$0xff]
      %v235 = vld [vmem:[%s1 + $0x10] sm:$0xff]
      %v236 = vld [vmem:[%s1 + $0x18] sm:$0xff]
      %v237 = vld [vmem:[%s2] sm:$0x1]
      %v239 = vlaneseq
      %v240 = vshrl.u32 %v239, 7
      %v241 = vsub.s32 0, %v240
      %v242 = vrot.slane %v237, %v241
      %vm244 = vcmask 261120
      %v246 = vsel %vm244, %v201, 0
      %v249 = vsel %vm244, %v202, 0
      %v252 = vsel %vm244, %v203, 0
      %v255 = vsel %vm244, %v204, 0
      %v258 = vsel %vm244, %v205, 0
      %v261 = vsel %vm244, %v206, 0
      %v264 = vsel %vm244, %v207, 0
      %v267 = vsel %vm244, %v208, 0
      %v270 = vsel %vm244, %v209, 0
      %v273 = vsel %vm244, %v210, 0
      %v276 = vsel %vm244, %v211, 0
      %v279 = vsel %vm244, %v212, 0
      %v282 = vsel %vm244, %v213, 0
      %v285 = vsel %vm244, %v214, 0
      %v288 = vsel %vm244, %v215, 0
      %v291 = vsel %vm244, %v216, 0
      %v294 = vsel %vm244, %v217, 0
      %v297 = vsel %vm244, %v218, 0
      %v300 = vsel %vm244, %v219, 0
      %v303 = vsel %vm244, %v220, 0
      %v306 = vsel %vm244, %v221, 0
      %v309 = vsel %vm244, %v222, 0
      %v312 = vsel %vm244, %v223, 0
      %v315 = vsel %vm244, %v224, 0
      %v318 = vsel %vm244, %v225, 0
      %v321 = vsel %vm244, %v226, 0
      %v324 = vsel %vm244, %v227, 0
      %v327 = vsel %vm244, %v228, 0
      %v330 = vsel %vm244, %v229, 0
      %v333 = vsel %vm244, %v230, 0
      %v336 = vsel %vm244, %v231, 0
      %v339 = vsel %vm244, %v232, 0
      %341 = vmatprep.subr.mxu0 0.0
      %342 = vmatpush1.msra.mxu0 %v233
      %343 = vmatprep.subr.mxu0 0.0
      %344 = vmatpush1.msra.mxu0 %v234
      %345 = vmatprep.subr.mxu0 0.0
      %346 = vmatpush1.msra.mxu0 %v235
      %347 = vmatprep.subr.mxu0 0.0
      %348 = vmatpush1.msra.mxu0 %v236
      %349 = vmatprep.subr.mxu0 0.0
      %350 = vmatpush1.msra.mxu0 0.0
      %351 = vmatprep.subr.mxu0 0.0
      %352 = vmatpush1.msra.mxu0 0.0
      %353 = vmatprep.subr.mxu0 0.0
      %354 = vmatpush1.msra.mxu0 0.0
      %355 = vmatprep.subr.mxu0 0.0
      %356 = vmatpush1.msra.mxu0 0.0
      %357 = vmatprep.subr.mxu0 0.0
      %358 = vmatpush1.msra.mxu0 0.0
      %359 = vmatprep.subr.mxu0 0.0
      %360 = vmatpush1.msra.mxu0 0.0
      %361 = vmatprep.subr.mxu0 0.0
      %362 = vmatpush1.msra.mxu0 0.0
      %363 = vmatprep.subr.mxu0 0.0
      %364 = vmatpush1.msra.mxu0 0.0
      %365 = vmatprep.subr.mxu0 0.0
      %366 = vmatpush1.msra.mxu0 0.0
      %367 = vmatprep.subr.mxu0 0.0
      %368 = vmatpush1.msra.mxu0 0.0
      %369 = vmatprep.subr.mxu0 0.0
      %370 = vmatpush1.msra.mxu0 0.0
      %371 = vmatprep.subr.mxu0 0.0
      %372 = vmatpush1.msra.mxu0 0.0
      %373 = vmatprep.subr.mxu0 0.0
      %374 = vmatpush1.msra.mxu0 0.0
      %375 = vmatprep.subr.mxu0 0.0
      %376 = vmatpush1.msra.mxu0 0.0
      %377 = vmatprep.subr.mxu0 0.0
      %378 = vmatpush1.msra.mxu0 0.0
      %379 = vmatprep.subr.mxu0 0.0
      %380 = vmatpush1.msra.mxu0 0.0
      %381 = vmatprep.subr.mxu0 0.0
      %382 = vmatpush1.msra.mxu0 0.0
      %383 = vmatprep.subr.mxu0 0.0
      %384 = vmatpush1.msra.mxu0 0.0
      %385 = vmatprep.subr.mxu0 0.0
      %386 = vmatpush1.msra.mxu0 0.0
      %387 = vmatprep.subr.mxu0 0.0
      %388 = vmatpush1.msra.mxu0 0.0
      %389 = vmatprep.subr.mxu0 0.0
      %390 = vmatpush1.msra.mxu0 0.0
      %391 = vmatprep.subr.mxu0 0.0
      %392 = vmatpush1.msra.mxu0 0.0
      %393 = vmatprep.subr.mxu0 0.0
      %394 = vmatpush1.msra.mxu0 0.0
      %395 = vmatprep.subr.mxu0 0.0
      %396 = vmatpush1.msra.mxu0 0.0
      %397 = vmatprep.subr.mxu0 0.0
      %398 = vmatpush1.msra.mxu0 0.0
      %399 = vmatprep.subr.mxu0 0.0
      %400 = vmatpush1.msra.mxu0 0.0
      %401 = vmatprep.subr.mxu0 0.0
      %402 = vmatpush1.msra.mxu0 0.0
      %403 = vmatprep.subr.mxu0 0.0
      %404 = vmatpush1.msra.mxu0 0.0
      %405 = vmatprep.mubr.f32.mxu0 0.0
      %406 = vmatmul.mubr.f32.gmra.mrb[0].mxu0 %v246
      %v407 = vpop.f32.mrb[0].mxu0
      %v408 = vadd.f32 %v242, %v407
      %v409 = vpop.f32.mrb[0].mxu0
      %410 = vmatprep.mubr.f32.mxu0 0.0
      %411 = vmatmul.mubr.f32.gmra.mrb[0].mxu0 %v249
      %v412 = vpop.f32.mrb[0].mxu0
      %v413 = vadd.f32 %v242, %v412
      %v414 = vpop.f32.mrb[0].mxu0
      %415 = vmatprep.mubr.f32.mxu0 0.0
      %416 = vmatmul.mubr.f32.gmra.mrb[0].mxu0 %v252
      %v417 = vpop.f32.mrb[0].mxu0
      %v418 = vadd.f32 %v242, %v417
      %v419 = vpop.f32.mrb[0].mxu0
      %420 = vmatprep.mubr.f32.mxu0 0.0
      %421 = vmatmul.mubr.f32.gmra.mrb[0].mxu0 %v255
      %v422 = vpop.f32.mrb[0].mxu0
      %v423 = vadd.f32 %v242, %v422
      %v424 = vpop.f32.mrb[0].mxu0
      %425 = vmatprep.mubr.f32.mxu0 0.0
      %426 = vmatmul.mubr.f32.gmra.mrb[0].mxu0 %v258
      %v427 = vpop.f32.mrb[0].mxu0
      %v428 = vadd.f32 %v242, %v427
      %v429 = vpop.f32.mrb[0].mxu0
      %430 = vmatprep.mubr.f32.mxu0 0.0
      %431 = vmatmul.mubr.f32.gmra.mrb[0].mxu0 %v261
      %v432 = vpop.f32.mrb[0].mxu0
      %v433 = vadd.f32 %v242, %v432
      %v434 = vpop.f32.mrb[0].mxu0
      %435 = vmatprep.mubr.f32.mxu0 0.0
      %436 = vmatmul.mubr.f32.gmra.mrb[0].mxu0 %v264
      %v437 = vpop.f32.mrb[0].mxu0
      %v438 = vadd.f32 %v242, %v437
      %v439 = vpop.f32.mrb[0].mxu0
      %440 = vmatprep.mubr.f32.mxu0 0.0
      %441 = vmatmul.mubr.f32.gmra.mrb[0].mxu0 %v267
      %v442 = vpop.f32.mrb[0].mxu0
      %v443 = vadd.f32 %v242, %v442
      %v444 = vpop.f32.mrb[0].mxu0
      %445 = vmatprep.mubr.f32.mxu0 0.0
      %446 = vmatmul.mubr.f32.gmra.mrb[0].mxu0 %v270
      %v447 = vpop.f32.mrb[0].mxu0
      %v448 = vadd.f32 %v242, %v447
      %v449 = vpop.f32.mrb[0].mxu0
      %450 = vmatprep.mubr.f32.mxu0 0.0
      %451 = vmatmul.mubr.f32.gmra.mrb[0].mxu0 %v273
      %v452 = vpop.f32.mrb[0].mxu0
      %v453 = vadd.f32 %v242, %v452
      %v454 = vpop.f32.mrb[0].mxu0
      %455 = vmatprep.mubr.f32.mxu0 0.0
      %456 = vmatmul.mubr.f32.gmra.mrb[0].mxu0 %v276
      %v457 = vpop.f32.mrb[0].mxu0
      %v458 = vadd.f32 %v242, %v457
      %v459 = vpop.f32.mrb[0].mxu0
      %460 = vmatprep.mubr.f32.mxu0 0.0
      %461 = vmatmul.mubr.f32.gmra.mrb[0].mxu0 %v279
      %v462 = vpop.f32.mrb[0].mxu0
      %v463 = vadd.f32 %v242, %v462
      %v464 = vpop.f32.mrb[0].mxu0
      %465 = vmatprep.mubr.f32.mxu0 0.0
      %466 = vmatmul.mubr.f32.gmra.mrb[0].mxu0 %v282
      %v467 = vpop.f32.mrb[0].mxu0
      %v468 = vadd.f32 %v242, %v467
      %v469 = vpop.f32.mrb[0].mxu0
      %470 = vmatprep.mubr.f32.mxu0 0.0
      %471 = vmatmul.mubr.f32.gmra.mrb[0].mxu0 %v285
      %v472 = vpop.f32.mrb[0].mxu0
      %v473 = vadd.f32 %v242, %v472
      %v474 = vpop.f32.mrb[0].mxu0
      %475 = vmatprep.mubr.f32.mxu0 0.0
      %476 = vmatmul.mubr.f32.gmra.mrb[0].mxu0 %v288
      %v477 = vpop.f32.mrb[0].mxu0
      %v478 = vadd.f32 %v242, %v477
      %v479 = vpop.f32.mrb[0].mxu0
      %480 = vmatprep.mubr.f32.mxu0 0.0
      %481 = vmatmul.mubr.f32.gmra.mrb[0].mxu0 %v291
      %v482 = vpop.f32.mrb[0].mxu0
      %v483 = vadd.f32 %v242, %v482
      %v484 = vpop.f32.mrb[0].mxu0
      %485 = vmatprep.mubr.f32.mxu0 0.0
      %486 = vmatmul.mubr.f32.gmra.mrb[0].mxu0 %v294
      %v487 = vpop.f32.mrb[0].mxu0
      %v488 = vadd.f32 %v242, %v487
      %v489 = vpop.f32.mrb[0].mxu0
      %490 = vmatprep.mubr.f32.mxu0 0.0
      %491 = vmatmul.mubr.f32.gmra.mrb[0].mxu0 %v297
      %v492 = vpop.f32.mrb[0].mxu0
      %v493 = vadd.f32 %v242, %v492
      %v494 = vpop.f32.mrb[0].mxu0
      %495 = vmatprep.mubr.f32.mxu0 0.0
      %496 = vmatmul.mubr.f32.gmra.mrb[0].mxu0 %v300
      %v497 = vpop.f32.mrb[0].mxu0
      %v498 = vadd.f32 %v242, %v497
      %v499 = vpop.f32.mrb[0].mxu0
      %500 = vmatprep.mubr.f32.mxu0 0.0
      %501 = vmatmul.mubr.f32.gmra.mrb[0].mxu0 %v303
      %v502 = vpop.f32.mrb[0].mxu0
      %v503 = vadd.f32 %v242, %v502
      %v504 = vpop.f32.mrb[0].mxu0
      %505 = vmatprep.mubr.f32.mxu0 0.0
      %506 = vmatmul.mubr.f32.gmra.mrb[0].mxu0 %v306
      %v507 = vpop.f32.mrb[0].mxu0
      %v508 = vadd.f32 %v242, %v507
      %v509 = vpop.f32.mrb[0].mxu0
      %510 = vmatprep.mubr.f32.mxu0 0.0
      %511 = vmatmul.mubr.f32.gmra.mrb[0].mxu0 %v309
      %v512 = vpop.f32.mrb[0].mxu0
      %v513 = vadd.f32 %v242, %v512
      %v514 = vpop.f32.mrb[0].mxu0
      %515 = vmatprep.mubr.f32.mxu0 0.0
      %516 = vmatmul.mubr.f32.gmra.mrb[0].mxu0 %v312
      %v517 = vpop.f32.mrb[0].mxu0
      %v518 = vadd.f32 %v242, %v517
      %v519 = vpop.f32.mrb[0].mxu0
      %520 = vmatprep.mubr.f32.mxu0 0.0
      %521 = vmatmul.mubr.f32.gmra.mrb[0].mxu0 %v315
      %v522 = vpop.f32.mrb[0].mxu0
      %v523 = vadd.f32 %v242, %v522
      %v524 = vpop.f32.mrb[0].mxu0
      %525 = vmatprep.mubr.f32.mxu0 0.0
      %526 = vmatmul.mubr.f32.gmra.mrb[0].mxu0 %v318
      %v527 = vpop.f32.mrb[0].mxu0
      %v528 = vadd.f32 %v242, %v527
      %v529 = vpop.f32.mrb[0].mxu0
      %530 = vmatprep.mubr.f32.mxu0 0.0
      %531 = vmatmul.mubr.f32.gmra.mrb[0].mxu0 %v321
      %v532 = vpop.f32.mrb[0].mxu0
      %v533 = vadd.f32 %v242, %v532
      %v534 = vpop.f32.mrb[0].mxu0
      %535 = vmatprep.mubr.f32.mxu0 0.0
      %536 = vmatmul.mubr.f32.gmra.mrb[0].mxu0 %v324
      %v537 = vpop.f32.mrb[0].mxu0
      %v538 = vadd.f32 %v242, %v537
      %v539 = vpop.f32.mrb[0].mxu0
      %540 = vmatprep.mubr.f32.mxu0 0.0
      %541 = vmatmul.mubr.f32.gmra.mrb[0].mxu0 %v327
      %v542 = vpop.f32.mrb[0].mxu0
      %v543 = vadd.f32 %v242, %v542
      %v544 = vpop.f32.mrb[0].mxu0
      %545 = vmatprep.mubr.f32.mxu0 0.0
      %546 = vmatmul.mubr.f32.gmra.mrb[0].mxu0 %v330
      %v547 = vpop.f32.mrb[0].mxu0
      %v548 = vadd.f32 %v242, %v547
      %v549 = vpop.f32.mrb[0].mxu0
      %550 = vmatprep.mubr.f32.mxu0 0.0
      %551 = vmatmul.mubr.f32.gmra.mrb[0].mxu0 %v333
      %v552 = vpop.f32.mrb[0].mxu0
      %v553 = vadd.f32 %v242, %v552
      %v554 = vpop.f32.mrb[0].mxu0
      %555 = vmatprep.mubr.f32.mxu0 0.0
      %556 = vmatmul.mubr.f32.gmra.mrb[0].mxu0 %v336
      %v557 = vpop.f32.mrb[0].mxu0
      %v558 = vadd.f32 %v242, %v557
      %v559 = vpop.f32.mrb[0].mxu0
      %560 = vmatprep.mubr.f32.mxu0 0.0
      %561 = vmatmul.mubr.f32.gmra.mrb[0].mxu0 %v339
      %v562 = vpop.f32.mrb[0].mxu0
      %v563 = vadd.f32 %v242, %v562
      %v564 = vpop.f32.mrb[0].mxu0
      %565 = vdwg.mxu0
      %v566 = vand.u32 2147483647, %v408
      %v567 = vand.u32 2147483647, %v413
      %v568 = vand.u32 2147483647, %v418
      %v569 = vand.u32 2147483647, %v423
      %v570 = vand.u32 2147483647, %v428
      %v571 = vand.u32 2147483647, %v433
      %v572 = vand.u32 2147483647, %v438
      %v573 = vand.u32 2147483647, %v443
      %v574 = vand.u32 2147483647, %v448
      %v575 = vand.u32 2147483647, %v453
      %v576 = vand.u32 2147483647, %v458
      %v577 = vand.u32 2147483647, %v463
      %v578 = vand.u32 2147483647, %v468
      %v579 = vand.u32 2147483647, %v473
      %v580 = vand.u32 2147483647, %v478
      %v581 = vand.u32 2147483647, %v483
      %v582 = vand.u32 2147483647, %v488
      %v583 = vand.u32 2147483647, %v493
      %v584 = vand.u32 2147483647, %v498
      %v585 = vand.u32 2147483647, %v503
      %v586 = vand.u32 2147483647, %v508
      %v587 = vand.u32 2147483647, %v513
      %v588 = vand.u32 2147483647, %v518
      %v589 = vand.u32 2147483647, %v523
      %v590 = vand.u32 2147483647, %v528
      %v591 = vand.u32 2147483647, %v533
      %v592 = vand.u32 2147483647, %v538
      %v593 = vand.u32 2147483647, %v543
      %v594 = vand.u32 2147483647, %v548
      %v595 = vand.u32 2147483647, %v553
      %v596 = vand.u32 2147483647, %v558
      %v597 = vand.u32 2147483647, %v563
      %vm598 = vcmask 130048
      %v599 = vsel %vm598, %v566, 0.0
      %600 = vadd.xlane.f32.xlu0 %v599
      %v601 = vpop.xlane.xlu0 %600
      %v602 = vsel %vm598, %v567, 0.0
      %603 = vadd.xlane.f32.xlu0 %v602
      %v604 = vpop.xlane.xlu0 %603
      %v605 = vsel %vm598, %v568, 0.0
      %606 = vadd.xlane.f32.xlu0 %v605
      %v607 = vpop.xlane.xlu0 %606
      %v608 = vsel %vm598, %v569, 0.0
      %609 = vadd.xlane.f32.xlu0 %v608
      %v610 = vpop.xlane.xlu0 %609
      %v611 = vsel %vm598, %v570, 0.0
      %612 = vadd.xlane.f32.xlu0 %v611
      %v613 = vpop.xlane.xlu0 %612
      %v614 = vsel %vm598, %v571, 0.0
      %615 = vadd.xlane.f32.xlu0 %v614
      %v616 = vpop.xlane.xlu0 %615
      %v617 = vsel %vm598, %v572, 0.0
      %618 = vadd.xlane.f32.xlu0 %v617
      %v619 = vpop.xlane.xlu0 %618
      %v620 = vsel %vm598, %v573, 0.0
      %621 = vadd.xlane.f32.xlu0 %v620
      %v622 = vpop.xlane.xlu0 %621
      %v623 = vsel %vm598, %v574, 0.0
      %624 = vadd.xlane.f32.xlu0 %v623
      %v625 = vpop.xlane.xlu0 %624
      %v626 = vsel %vm598, %v575, 0.0
      %627 = vadd.xlane.f32.xlu0 %v626
      %v628 = vpop.xlane.xlu0 %627
      %v629 = vsel %vm598, %v576, 0.0
      %630 = vadd.xlane.f32.xlu0 %v629
      %v631 = vpop.xlane.xlu0 %630
      %v632 = vsel %vm598, %v577, 0.0
      %633 = vadd.xlane.f32.xlu0 %v632
      %v634 = vpop.xlane.xlu0 %633
      %v635 = vsel %vm598, %v578, 0.0
      %636 = vadd.xlane.f32.xlu0 %v635
      %v637 = vpop.xlane.xlu0 %636
      %v638 = vsel %vm598, %v579, 0.0
      %639 = vadd.xlane.f32.xlu0 %v638
      %v640 = vpop.xlane.xlu0 %639
      %v641 = vsel %vm598, %v580, 0.0
      %642 = vadd.xlane.f32.xlu0 %v641
      %v643 = vpop.xlane.xlu0 %642
      %v644 = vsel %vm598, %v581, 0.0
      %645 = vadd.xlane.f32.xlu0 %v644
      %v646 = vpop.xlane.xlu0 %645
      %v647 = vsel %vm598, %v582, 0.0
      %648 = vadd.xlane.f32.xlu0 %v647
      %v649 = vpop.xlane.xlu0 %648
      %v650 = vsel %vm598, %v583, 0.0
      %651 = vadd.xlane.f32.xlu0 %v650
      %v652 = vpop.xlane.xlu0 %651
      %v653 = vsel %vm598, %v584, 0.0
      %654 = vadd.xlane.f32.xlu0 %v653
      %v655 = vpop.xlane.xlu0 %654
      %v656 = vsel %vm598, %v585, 0.0
      %657 = vadd.xlane.f32.xlu0 %v656
      %v658 = vpop.xlane.xlu0 %657
      %v659 = vsel %vm598, %v586, 0.0
      %660 = vadd.xlane.f32.xlu0 %v659
      %v661 = vpop.xlane.xlu0 %660
      %v662 = vsel %vm598, %v587, 0.0
      %663 = vadd.xlane.f32.xlu0 %v662
      %v664 = vpop.xlane.xlu0 %663
      %v665 = vsel %vm598, %v588, 0.0
      %666 = vadd.xlane.f32.xlu0 %v665
      %v667 = vpop.xlane.xlu0 %666
      %v668 = vsel %vm598, %v589, 0.0
      %669 = vadd.xlane.f32.xlu0 %v668
      %v670 = vpop.xlane.xlu0 %669
      %v671 = vsel %vm598, %v590, 0.0
      %672 = vadd.xlane.f32.xlu0 %v671
      %v673 = vpop.xlane.xlu0 %672
      %v674 = vsel %vm598, %v591, 0.0
      %675 = vadd.xlane.f32.xlu0 %v674
      %v676 = vpop.xlane.xlu0 %675
      %v677 = vsel %vm598, %v592, 0.0
      %678 = vadd.xlane.f32.xlu0 %v677
      %v679 = vpop.xlane.xlu0 %678
      %v680 = vsel %vm598, %v593, 0.0
      %681 = vadd.xlane.f32.xlu0 %v680
      %v682 = vpop.xlane.xlu0 %681
      %v683 = vsel %vm598, %v594, 0.0
      %684 = vadd.xlane.f32.xlu0 %v683
      %v685 = vpop.xlane.xlu0 %684
      %v686 = vsel %vm598, %v595, 0.0
      %687 = vadd.xlane.f32.xlu0 %v686
      %v688 = vpop.xlane.xlu0 %687
      %v689 = vsel %vm598, %v596, 0.0
      %690 = vadd.xlane.f32.xlu0 %v689
      %v691 = vpop.xlane.xlu0 %690
      %v692 = vsel %vm598, %v597, 0.0
      %693 = vadd.xlane.f32.xlu0 %v692
      %v694 = vpop.xlane.xlu0 %693
      %v695 = vmax.f32 %v601, 1e-12
      %v696 = vmax.f32 %v604, 1e-12
      %v697 = vmax.f32 %v607, 1e-12
      %v698 = vmax.f32 %v610, 1e-12
      %v699 = vmax.f32 %v613, 1e-12
      %v700 = vmax.f32 %v616, 1e-12
      %v701 = vmax.f32 %v619, 1e-12
      %v702 = vmax.f32 %v622, 1e-12
      %v703 = vmax.f32 %v625, 1e-12
      %v704 = vmax.f32 %v628, 1e-12
      %v705 = vmax.f32 %v631, 1e-12
      %v706 = vmax.f32 %v634, 1e-12
      %v707 = vmax.f32 %v637, 1e-12
      %v708 = vmax.f32 %v640, 1e-12
      %v709 = vmax.f32 %v643, 1e-12
      %v710 = vmax.f32 %v646, 1e-12
      %v711 = vmax.f32 %v649, 1e-12
      %v712 = vmax.f32 %v652, 1e-12
      %v713 = vmax.f32 %v655, 1e-12
      %v714 = vmax.f32 %v658, 1e-12
      %v715 = vmax.f32 %v661, 1e-12
      %v716 = vmax.f32 %v664, 1e-12
      %v717 = vmax.f32 %v667, 1e-12
      %v718 = vmax.f32 %v670, 1e-12
      %v719 = vmax.f32 %v673, 1e-12
      %v720 = vmax.f32 %v676, 1e-12
      %v721 = vmax.f32 %v679, 1e-12
      %v722 = vmax.f32 %v682, 1e-12
      %v723 = vmax.f32 %v685, 1e-12
      %v724 = vmax.f32 %v688, 1e-12
      %v725 = vmax.f32 %v691, 1e-12
      %v726 = vmax.f32 %v694, 1e-12
      %v727 = vrcp.pop %v695
      %v728 = vrcp.pop %v696
      %v729 = vrcp.pop %v697
      %v730 = vrcp.pop %v698
      %v731 = vrcp.pop %v699
      %v732 = vrcp.pop %v700
      %v733 = vrcp.pop %v701
      %v734 = vrcp.pop %v702
      %v735 = vrcp.pop %v703
      %v736 = vrcp.pop %v704
      %v737 = vrcp.pop %v705
      %v738 = vrcp.pop %v706
      %v739 = vrcp.pop %v707
      %v740 = vrcp.pop %v708
      %v741 = vrcp.pop %v709
      %v742 = vrcp.pop %v710
      %v743 = vrcp.pop %v711
      %v744 = vrcp.pop %v712
      %v745 = vrcp.pop %v713
      %v746 = vrcp.pop %v714
      %v747 = vrcp.pop %v715
      %v748 = vrcp.pop %v716
      %v749 = vrcp.pop %v717
      %v750 = vrcp.pop %v718
      %v751 = vrcp.pop %v719
      %v752 = vrcp.pop %v720
      %v753 = vrcp.pop %v721
      %v754 = vrcp.pop %v722
      %v755 = vrcp.pop %v723
      %v756 = vrcp.pop %v724
      %v757 = vrcp.pop %v725
      %v758 = vrcp.pop %v726
      %v759 = vmul.f32 %v408, %v727
      %v760 = vmul.f32 %v413, %v728
      %v761 = vmul.f32 %v418, %v729
      %v762 = vmul.f32 %v423, %v730
      %v763 = vmul.f32 %v428, %v731
      %v764 = vmul.f32 %v433, %v732
      %v765 = vmul.f32 %v438, %v733
      %v766 = vmul.f32 %v443, %v734
      %v767 = vmul.f32 %v448, %v735
      %v768 = vmul.f32 %v453, %v736
      %v769 = vmul.f32 %v458, %v737
      %v770 = vmul.f32 %v463, %v738
      %v771 = vmul.f32 %v468, %v739
      %v772 = vmul.f32 %v473, %v740
      %v773 = vmul.f32 %v478, %v741
      %v774 = vmul.f32 %v483, %v742
      %v775 = vmul.f32 %v488, %v743
      %v776 = vmul.f32 %v493, %v744
      %v777 = vmul.f32 %v498, %v745
      %v778 = vmul.f32 %v503, %v746
      %v779 = vmul.f32 %v508, %v747
      %v780 = vmul.f32 %v513, %v748
      %v781 = vmul.f32 %v518, %v749
      %v782 = vmul.f32 %v523, %v750
      %v783 = vmul.f32 %v528, %v751
      %v784 = vmul.f32 %v533, %v752
      %v785 = vmul.f32 %v538, %v753
      %v786 = vmul.f32 %v543, %v754
      %v787 = vmul.f32 %v548, %v755
      %v788 = vmul.f32 %v553, %v756
      %v789 = vmul.f32 %v558, %v757
      %v790 = vmul.f32 %v563, %v758
      %v791 = vmax.f32 %v759, 0.0
      %v792 = vmax.f32 %v760, 0.0
      %v793 = vmax.f32 %v761, 0.0
      %v794 = vmax.f32 %v762, 0.0
      %v795 = vmax.f32 %v763, 0.0
      %v796 = vmax.f32 %v764, 0.0
      %v797 = vmax.f32 %v765, 0.0
      %v798 = vmax.f32 %v766, 0.0
      %v799 = vmax.f32 %v767, 0.0
      %v800 = vmax.f32 %v768, 0.0
      %v801 = vmax.f32 %v769, 0.0
      %v802 = vmax.f32 %v770, 0.0
      %v803 = vmax.f32 %v771, 0.0
      %v804 = vmax.f32 %v772, 0.0
      %v805 = vmax.f32 %v773, 0.0
      %v806 = vmax.f32 %v774, 0.0
      %v807 = vmax.f32 %v775, 0.0
      %v808 = vmax.f32 %v776, 0.0
      %v809 = vmax.f32 %v777, 0.0
      %v810 = vmax.f32 %v778, 0.0
      %v811 = vmax.f32 %v779, 0.0
      %v812 = vmax.f32 %v780, 0.0
      %v813 = vmax.f32 %v781, 0.0
      %v814 = vmax.f32 %v782, 0.0
      %v815 = vmax.f32 %v783, 0.0
      %v816 = vmax.f32 %v784, 0.0
      %v817 = vmax.f32 %v785, 0.0
      %v818 = vmax.f32 %v786, 0.0
      %v819 = vmax.f32 %v787, 0.0
      %v820 = vmax.f32 %v788, 0.0
      %v821 = vmax.f32 %v789, 0.0
      %v822 = vmax.f32 %v790, 0.0
      %v823 = vld [vmem:[%s3] sm:$0x1]
      %v825 = vlaneseq
      %v826 = vshrl.u32 %v825, 7
      %v827 = vsub.s32 0, %v826
      %v828 = vrot.slane %v823, %v827
      %v830 = vmul.f32 %v791, %v828
      %v831 = vmul.f32 %v792, %v828
      %v832 = vmul.f32 %v793, %v828
      %v833 = vmul.f32 %v794, %v828
      %v834 = vmul.f32 %v795, %v828
      %v835 = vmul.f32 %v796, %v828
      %v836 = vmul.f32 %v797, %v828
      %v837 = vmul.f32 %v798, %v828
      %v838 = vmul.f32 %v799, %v828
      %v839 = vmul.f32 %v800, %v828
      %v840 = vmul.f32 %v801, %v828
      %v841 = vmul.f32 %v802, %v828
      %v842 = vmul.f32 %v803, %v828
      %v843 = vmul.f32 %v804, %v828
      %v844 = vmul.f32 %v805, %v828
      %v845 = vmul.f32 %v806, %v828
      %v846 = vmul.f32 %v807, %v828
      %v847 = vmul.f32 %v808, %v828
      %v848 = vmul.f32 %v809, %v828
      %v849 = vmul.f32 %v810, %v828
      %v850 = vmul.f32 %v811, %v828
      %v851 = vmul.f32 %v812, %v828
      %v852 = vmul.f32 %v813, %v828
      %v853 = vmul.f32 %v814, %v828
      %v854 = vmul.f32 %v815, %v828
      %v855 = vmul.f32 %v816, %v828
      %v856 = vmul.f32 %v817, %v828
      %v857 = vmul.f32 %v818, %v828
      %v858 = vmul.f32 %v819, %v828
      %v859 = vmul.f32 %v820, %v828
      %v860 = vmul.f32 %v821, %v828
      %v861 = vmul.f32 %v822, %v828
      %v862 = vsel %vm598, %v830, 0.0
      %863 = vadd.xlane.f32.xlu0 %v862
      %v864 = vpop.xlane.xlu0 %863
      %v865 = vsel %vm598, %v831, 0.0
      %866 = vadd.xlane.f32.xlu0 %v865
      %v867 = vpop.xlane.xlu0 %866
      %v868 = vsel %vm598, %v832, 0.0
      %869 = vadd.xlane.f32.xlu0 %v868
      %v870 = vpop.xlane.xlu0 %869
      %v871 = vsel %vm598, %v833, 0.0
      %872 = vadd.xlane.f32.xlu0 %v871
      %v873 = vpop.xlane.xlu0 %872
      %v874 = vsel %vm598, %v834, 0.0
      %875 = vadd.xlane.f32.xlu0 %v874
      %v876 = vpop.xlane.xlu0 %875
      %v877 = vsel %vm598, %v835, 0.0
      %878 = vadd.xlane.f32.xlu0 %v877
      %v879 = vpop.xlane.xlu0 %878
      %v880 = vsel %vm598, %v836, 0.0
      %881 = vadd.xlane.f32.xlu0 %v880
      %v882 = vpop.xlane.xlu0 %881
      %v883 = vsel %vm598, %v837, 0.0
      %884 = vadd.xlane.f32.xlu0 %v883
      %v885 = vpop.xlane.xlu0 %884
      %v886 = vsel %vm598, %v838, 0.0
      %887 = vadd.xlane.f32.xlu0 %v886
      %v888 = vpop.xlane.xlu0 %887
      %v889 = vsel %vm598, %v839, 0.0
      %890 = vadd.xlane.f32.xlu0 %v889
      %v891 = vpop.xlane.xlu0 %890
      %v892 = vsel %vm598, %v840, 0.0
      %893 = vadd.xlane.f32.xlu0 %v892
      %v894 = vpop.xlane.xlu0 %893
      %v895 = vsel %vm598, %v841, 0.0
      %896 = vadd.xlane.f32.xlu0 %v895
      %v897 = vpop.xlane.xlu0 %896
      %v898 = vsel %vm598, %v842, 0.0
      %899 = vadd.xlane.f32.xlu0 %v898
      %v900 = vpop.xlane.xlu0 %899
      %v901 = vsel %vm598, %v843, 0.0
      %902 = vadd.xlane.f32.xlu0 %v901
      %v903 = vpop.xlane.xlu0 %902
      %v904 = vsel %vm598, %v844, 0.0
      %905 = vadd.xlane.f32.xlu0 %v904
      %v906 = vpop.xlane.xlu0 %905
      %v907 = vsel %vm598, %v845, 0.0
      %908 = vadd.xlane.f32.xlu0 %v907
      %v909 = vpop.xlane.xlu0 %908
      %v910 = vsel %vm598, %v846, 0.0
      %911 = vadd.xlane.f32.xlu0 %v910
      %v912 = vpop.xlane.xlu0 %911
      %v913 = vsel %vm598, %v847, 0.0
      %914 = vadd.xlane.f32.xlu0 %v913
      %v915 = vpop.xlane.xlu0 %914
      %v916 = vsel %vm598, %v848, 0.0
      %917 = vadd.xlane.f32.xlu0 %v916
      %v918 = vpop.xlane.xlu0 %917
      %v919 = vsel %vm598, %v849, 0.0
      %920 = vadd.xlane.f32.xlu0 %v919
      %v921 = vpop.xlane.xlu0 %920
      %v922 = vsel %vm598, %v850, 0.0
      %923 = vadd.xlane.f32.xlu0 %v922
      %v924 = vpop.xlane.xlu0 %923
      %v925 = vsel %vm598, %v851, 0.0
      %926 = vadd.xlane.f32.xlu0 %v925
      %v927 = vpop.xlane.xlu0 %926
      %v928 = vsel %vm598, %v852, 0.0
      %929 = vadd.xlane.f32.xlu0 %v928
      %v930 = vpop.xlane.xlu0 %929
      %v931 = vsel %vm598, %v853, 0.0
      %932 = vadd.xlane.f32.xlu0 %v931
      %v933 = vpop.xlane.xlu0 %932
      %v934 = vsel %vm598, %v854, 0.0
      %935 = vadd.xlane.f32.xlu0 %v934
      %v936 = vpop.xlane.xlu0 %935
      %v937 = vsel %vm598, %v855, 0.0
      %938 = vadd.xlane.f32.xlu0 %v937
      %v939 = vpop.xlane.xlu0 %938
      %v940 = vsel %vm598, %v856, 0.0
      %941 = vadd.xlane.f32.xlu0 %v940
      %v942 = vpop.xlane.xlu0 %941
      %v943 = vsel %vm598, %v857, 0.0
      %944 = vadd.xlane.f32.xlu0 %v943
      %v945 = vpop.xlane.xlu0 %944
      %v946 = vsel %vm598, %v858, 0.0
      %947 = vadd.xlane.f32.xlu0 %v946
      %v948 = vpop.xlane.xlu0 %947
      %v949 = vsel %vm598, %v859, 0.0
      %950 = vadd.xlane.f32.xlu0 %v949
      %v951 = vpop.xlane.xlu0 %950
      %v952 = vsel %vm598, %v860, 0.0
      %953 = vadd.xlane.f32.xlu0 %v952
      %v954 = vpop.xlane.xlu0 %953
      %v955 = vsel %vm598, %v861, 0.0
      %956 = vadd.xlane.f32.xlu0 %v955
      %v957 = vpop.xlane.xlu0 %956
      %vm958 = vcmask 7168
      %959 = vst.msk [vmem:[%s199] sm:$0xff] %vm958, %v864
      %960 = vst.msk [vmem:[%s199 + $0x8] sm:$0xff] %vm958, %v867
      %961 = vst.msk [vmem:[%s199 + $0x10] sm:$0xff] %vm958, %v870
      %962 = vst.msk [vmem:[%s199 + $0x18] sm:$0xff] %vm958, %v873
      %963 = vst.msk [vmem:[%s199 + $0x20] sm:$0xff] %vm958, %v876
      %964 = vst.msk [vmem:[%s199 + $0x28] sm:$0xff] %vm958, %v879
      %965 = vst.msk [vmem:[%s199 + $0x30] sm:$0xff] %vm958, %v882
      %966 = vst.msk [vmem:[%s199 + $0x38] sm:$0xff] %vm958, %v885
      %967 = vst.msk [vmem:[%s199 + $0x40] sm:$0xff] %vm958, %v888
      %968 = vst.msk [vmem:[%s199 + $0x48] sm:$0xff] %vm958, %v891
      %969 = vst.msk [vmem:[%s199 + $0x50] sm:$0xff] %vm958, %v894
      %970 = vst.msk [vmem:[%s199 + $0x58] sm:$0xff] %vm958, %v897
      %971 = vst.msk [vmem:[%s199 + $0x60] sm:$0xff] %vm958, %v900
      %972 = vst.msk [vmem:[%s199 + $0x68] sm:$0xff] %vm958, %v903
      %973 = vst.msk [vmem:[%s199 + $0x70] sm:$0xff] %vm958, %v906
      %974 = vst.msk [vmem:[%s199 + $0x78] sm:$0xff] %vm958, %v909
      %975 = vst.msk [vmem:[%s199 + $0x80] sm:$0xff] %vm958, %v912
      %976 = vst.msk [vmem:[%s199 + $0x88] sm:$0xff] %vm958, %v915
      %977 = vst.msk [vmem:[%s199 + $0x90] sm:$0xff] %vm958, %v918
      %978 = vst.msk [vmem:[%s199 + $0x98] sm:$0xff] %vm958, %v921
      %979 = vst.msk [vmem:[%s199 + $0xa0] sm:$0xff] %vm958, %v924
      %980 = vst.msk [vmem:[%s199 + $0xa8] sm:$0xff] %vm958, %v927
      %981 = vst.msk [vmem:[%s199 + $0xb0] sm:$0xff] %vm958, %v930
      %982 = vst.msk [vmem:[%s199 + $0xb8] sm:$0xff] %vm958, %v933
      %983 = vst.msk [vmem:[%s199 + $0xc0] sm:$0xff] %vm958, %v936
      %984 = vst.msk [vmem:[%s199 + $0xc8] sm:$0xff] %vm958, %v939
      %985 = vst.msk [vmem:[%s199 + $0xd0] sm:$0xff] %vm958, %v942
      %986 = vst.msk [vmem:[%s199 + $0xd8] sm:$0xff] %vm958, %v945
      %987 = vst.msk [vmem:[%s199 + $0xe0] sm:$0xff] %vm958, %v948
      %988 = vst.msk [vmem:[%s199 + $0xe8] sm:$0xff] %vm958, %v951
      %989 = vst.msk [vmem:[%s199 + $0xf0] sm:$0xff] %vm958, %v954
      %990 = vst.msk [vmem:[%s199 + $0xf8] sm:$0xff] %vm958, %v957
      %s991 = smul.u32 32, %s15
      %p992 = scmp.lt.s32.totalorder %s991, 63
      %s993 = scalar_select %p992, %s991, 63
      %s994 = smul.addr %s993, 8
      %s995 = scalar_lea.vmem %s4, %s994
      // Predicated region
      $region37: #{tpu_custom_call.1} parent=35 // pred_check
        %p996 = pneg %p122
      $region38: #{tpu_custom_call.1} parent=35 // pred_check_branch
        %998 = sbr.rel (%p996) target = $region40
      $region39: #{tpu_custom_call.1} parent=35 // pred_region
        %s999 = smul.u32 32, %s15
      $region40: #{tpu_custom_call.1} parent=35 // pred_fallthru
        _
    $region36: #{tpu_custom_call.1} parent=5 // pred_fallthru
      _
    %p1000 = scmp.le.s32.totalorder 2, %s10
    // Predicated region
    $region41: #{tpu_custom_call.1} parent=5 // pred_check
      %p1001 = pneg %p1000
    $region42: #{tpu_custom_call.1} parent=5 // pred_check_branch
      %1003 = sbr.rel (%p1001) target = $region44
    $region43: #{tpu_custom_call.1} parent=5 // pred_region
      %s1004 = ssub.s32 %s10, 2
      // Predicated region
      $region45: #{tpu_custom_call.1} parent=43 // pred_check
        %p1005 = pneg %p128
      $region46: #{tpu_custom_call.1} parent=43 // pred_check_branch
        %1007 = sbr.rel (%p1005) target = $region48
      $region47: #{tpu_custom_call.1} parent=43 // pred_region
        %s1008 = smul.u32 32, %s16
        %p1009 = scmp.lt.s32.totalorder %s1008, 63
        %s1010 = scalar_select %p1009, %s1008, 63
        %s1011 = smul.addr %s1010, 8
        %s1012 = scalar_lea.vmem %s4, %s1011
      $region48: #{tpu_custom_call.1} parent=43 // pred_fallthru
        _
    $region44: #{tpu_custom_call.1} parent=5 // pred_fallthru
      _
  $region6: #{tpu_custom_call.1} parent=0 // loop_footer
    %s14 = sadd.s32 1, %s10
  $region7: #{tpu_custom_call.1} parent=0 // loop_footer_branch
    %9 = sbr.rel target = $region3
  $region8: #{tpu_custom_call.1} parent=0 // loop_exit
    _

</llo_original>
